<compile_context>
chip_gen: v5e
topology: v5e:2x2
jax: 0.10.0
libtpu: 0.0.40
codegen_flags: <defaults>
</compile_context>

<pallas_src>
import jax
import jax.numpy as jnp
from jax.experimental import pallas as pl
from jax.experimental.pallas import tpu as pltpu

INPUT_SIZE = 10
OUTPUT_SIZE = 5

# Rows per grid tile on the large-batch path. Padded footprint ~1 KiB/row for
# x + out (last dims pad to 128 lanes), double-buffered ~2 KiB/row -> ~16 MiB.
_TB = 8192

# Scoped-VMEM budget: above v5e/v6e defaults (16/32 MiB), with headroom under
# v7x's 64 MiB physical VMEM.
_VMEM_LIMIT_BYTES = 40 * 1024 * 1024


def linear_kernel(x_ref, wt_ref, b_ref, o_ref):
    # x_ref: (TB, IN), wt_ref: (IN, OUT), b_ref: (1, OUT), o_ref: (TB, OUT).
    # Weight arrives already transposed ([IN, OUT]) -- no in-kernel relayout.
    y = jnp.dot(
        x_ref[...],
        wt_ref[...],
        preferred_element_type=jnp.float32,
        precision=jax.lax.Precision.HIGHEST,
    )
    o_ref[...] = (y + b_ref[...]).astype(o_ref.dtype)


@jax.jit
def small_model_forward(x, w, b):
    """x: [B, IN] f32, w: [OUT, IN] f32 (PyTorch layout), b: [OUT] f32 -> [B, OUT]."""
    B = x.shape[0]
    wt = w.T                       # once, in the (jitted) wrapper: MXU-ready [IN, OUT]
    b2d = b.reshape(1, OUTPUT_SIZE)

    cost = pl.CostEstimate(
        flops=2 * B * INPUT_SIZE * OUTPUT_SIZE,
        transcendentals=0,
        bytes_accessed=B * (INPUT_SIZE + OUTPUT_SIZE) * 4
        + INPUT_SIZE * OUTPUT_SIZE * 4
        + OUTPUT_SIZE * 4,
    )

    if B <= _TB:
        # Small/medium batch: no grid, whole arrays resident in VMEM for one
        # shot (no per-step grid bookkeeping, no double-buffer DMAs for a
        # 20-byte bias).
        return pl.pallas_call(
            linear_kernel,
            out_shape=jax.ShapeDtypeStruct((B, OUTPUT_SIZE), x.dtype),
            in_specs=[
                pl.BlockSpec(memory_space=pltpu.MemorySpace.VMEM),
                pl.BlockSpec(memory_space=pltpu.MemorySpace.VMEM),
                pl.BlockSpec(memory_space=pltpu.MemorySpace.VMEM),
            ],
            out_specs=pl.BlockSpec(memory_space=pltpu.MemorySpace.VMEM),
            cost_estimate=cost,
            compiler_params=pltpu.CompilerParams(
                vmem_limit_bytes=_VMEM_LIMIT_BYTES,
            ),
        )(x, wt, b2d)

    # Large batch: tile only over B; weight and bias tiles are grid-invariant.
    # "parallel" lets v7x shard grid steps across its 2 TensorCores.
    # NOTE: when B % _TB != 0 the last block is ragged; Pallas masks the
    # out-of-range stores so results are correct, but the padded garbage rows
    # DO flow through the matmul -- fine here (rows are independent); do not
    # add a cross-row reduction epilogue without masking them.
    return pl.pallas_call(
        linear_kernel,
        out_shape=jax.ShapeDtypeStruct((B, OUTPUT_SIZE), x.dtype),
        grid=(pl.cdiv(B, _TB),),
        in_specs=[
            pl.BlockSpec((_TB, INPUT_SIZE), lambda i: (i, 0)),
            pl.BlockSpec((INPUT_SIZE, OUTPUT_SIZE), lambda i: (0, 0)),
            pl.BlockSpec((1, OUTPUT_SIZE), lambda i: (0, 0)),
        ],
        out_specs=pl.BlockSpec((_TB, OUTPUT_SIZE), lambda i: (i, 0)),
        cost_estimate=cost,
        compiler_params=pltpu.CompilerParams(
            dimension_semantics=("parallel",),
            vmem_limit_bytes=_VMEM_LIMIT_BYTES,
        ),
    )(x, wt, b2d)


if __name__ == "__main__":
    key = jax.random.PRNGKey(0)
    kx, kw, kb = jax.random.split(key, 3)

    # Deterministic parameter init matching PyTorch Linear's default
    # U(-1/sqrt(in_features), 1/sqrt(in_features)) ranges.
    bound = 1.0 / (INPUT_SIZE ** 0.5)
    w = jax.random.uniform(kw, (OUTPUT_SIZE, INPUT_SIZE),
                           minval=-bound, maxval=bound, dtype=jnp.float32)
    b = jax.random.uniform(kb, (OUTPUT_SIZE,),
                           minval=-bound, maxval=bound, dtype=jnp.float32)

    # Small batch -> gridless whole-array VMEM path.
    B = 8
    x = jax.random.normal(kx, (B, INPUT_SIZE), dtype=jnp.float32)
    out = small_model_forward(x, w, b)
    jax.block_until_ready(out)

    ref = x @ w.T + b
    assert out.shape == (B, OUTPUT_SIZE)
    assert jnp.allclose(out, ref, atol=1e-5, rtol=1e-5)

    # Large batch -> B-tiled grid path, including a ragged last block.
    B2 = _TB + 512
    x2 = jax.random.normal(kx, (B2, INPUT_SIZE), dtype=jnp.float32)
    out2 = small_model_forward(x2, w, b)
    jax.block_until_ready(out2)
    ref2 = x2 @ w.T + b
    assert out2.shape == (B2, OUTPUT_SIZE)
    assert jnp.allclose(out2, ref2, atol=1e-5, rtol=1e-5)

    print("KERNEL_OK")
</pallas_src>

<mosaic_0001>
module attributes {stable_mosaic.version = 11 : i64} {
  func.func @linear_kernel(%arg0: memref<8x10xf32, #tpu.memory_space<vmem>>, %arg1: memref<10x5xf32, #tpu.memory_space<vmem>>, %arg2: memref<1x5xf32, #tpu.memory_space<vmem>>, %arg3: memref<8x5xf32, #tpu.memory_space<vmem>>) attributes {dimension_semantics = [], scalar_prefetch = 0 : i64, scratch_operands = 0 : i64, tpu.core_type = #tpu.core_type<tc>} {
    %c0 = arith.constant 0 : index
    %c0_0 = arith.constant 0 : index
    %0 = vector.load %arg0[%c0, %c0_0] : memref<8x10xf32, #tpu.memory_space<vmem>>, vector<8x10xf32>
    %c0_1 = arith.constant 0 : index
    %c0_2 = arith.constant 0 : index
    %1 = vector.load %arg1[%c0_1, %c0_2] : memref<10x5xf32, #tpu.memory_space<vmem>>, vector<10x5xf32>
    %cst = arith.constant dense<0.000000e+00> : vector<8x5xf32>
    %2 = tpu.matmul %0, %1, %cst {dimension_numbers = #tpu.dot_dimension_numbers<[1], [0], [0], [1], [0, 0, 1, 1], [], []>, precision = #tpu.contract_precision<fp32>} : vector<8x10xf32>, vector<10x5xf32>, vector<8x5xf32> -> vector<8x5xf32>
    %c0_3 = arith.constant 0 : index
    %c0_4 = arith.constant 0 : index
    %3 = vector.load %arg2[%c0_3, %c0_4] : memref<1x5xf32, #tpu.memory_space<vmem>>, vector<1x5xf32>
    %4 = vector.broadcast %3 : vector<1x5xf32> to vector<8x5xf32>
    %5 = arith.addf %2, %4 : vector<8x5xf32>
    %c0_5 = arith.constant 0 : index
    %c0_6 = arith.constant 0 : index
    %6 = vector.load %arg3[%c0_5, %c0_6] : memref<8x5xf32, #tpu.memory_space<vmem>>, vector<8x5xf32>
    tpu.vector_store %arg3[%c0_5, %c0_6], %5 {strides = array<i32>} : memref<8x5xf32, #tpu.memory_space<vmem>>, vector<8x5xf32>,
    return
  }
}

</mosaic_0001>

<llo_original>
// kernel: small_model_forward.1
$region0: #{small_model_forward.1}
  #allocation0 [shape = 'u32[]', space=smem, size = 0x4, offset = 0x4, fixed_abs, tag = 'smem constant byte address 0x4 - core index']
  #allocation1 [shape = 'u32[72,128]{1,0:T(1,128)}', space=vmem, size = 0x9000, scoped, tag = 'internal scratch']
  %s0 = inlined_call_operand.vmem [shape: f32[8,10], index: 0, kind: input, shape index: {}]
  %s1 = inlined_call_operand.vmem [shape: f32[10,5], index: 1, kind: input, shape index: {}]
  %s2 = inlined_call_operand.vmem [shape: f32[1,5], index: 2, kind: input, shape index: {}]
  %s3 = inlined_call_operand.hbm [shape: f32[8,5], index: 3, kind: output, shape index: {}]
  %s4 = sld [smem:[#allocation0]]
  $region22: #{small_model_forward.1} parent=0
    _
  %s6 = ssub.s32 1, %s4
  %s7 = scalar_select 0, %s6, %s4
  $region1: #{small_model_forward.1} parent=0
    #allocation2 [shape = 'u8[4096]{0}', space=vmem, size = 0x1000, scoped, tag = 'output window, operand 0, single buffered']
    #allocation3 [shape = 's32[1]{0}', space=sflag, size = 0x4, scoped, tag = 'scoped memory for small_model_forward.1']
    %8 = vsyncpa [#allocation3], 0
    // Predicated region
    $region2: #{small_model_forward.1} parent=1 // pred_check
      _
    $region3: #{small_model_forward.1} parent=1 // pred_check_branch
      %10 = sbr.rel (0) target = $region5
    $region4: #{small_model_forward.1} parent=1 // pred_region
      _
    $region5: #{small_model_forward.1} parent=1 // pred_fallthru
      _
    // Predicated region
    $region6: #{small_model_forward.1} parent=1 // pred_check
      _
    $region7: #{small_model_forward.1} parent=1 // pred_check_branch
      %12 = sbr.rel (0) target = $region9
    $region8: #{small_model_forward.1} parent=1 // pred_region
      _
    $region9: #{small_model_forward.1} parent=1 // pred_fallthru
      _
    // Predicated region
    $region10: #{small_model_forward.1} parent=1 // pred_check
      _
    $region11: #{small_model_forward.1} parent=1 // pred_check_branch
      %14 = sbr.rel (0) target = $region13
    $region12: #{small_model_forward.1} parent=1 // pred_region
      _
    $region13: #{small_model_forward.1} parent=1 // pred_fallthru
      _
    %v15 = vld [vmem:[%s0] sm:$0xff]
    %v16 = vld [vmem:[%s1] sm:$0xff]
    %v17 = vld [vmem:[%s1 + $0x8] sm:$0x3]
    %v18 = vld [vmem:[%s2] sm:$0x1]
    %v20 = vperm.slane %v18, 0
    %vm22 = vcmask 80896
    %v24 = vsel %vm22, %v15, 0
    %vm26 = vcmask 1041408
    %v28 = vsel %vm26, %v17, 0
    %30 = vmatpush.msra.mxu0 0.0
    %31 = vmatpush.msra.mxu0 0.0
    %32 = vmatpush.msra.mxu0 0.0
    %33 = vmatpush.msra.mxu0 0.0
    %34 = vmatpush.msra.mxu0 0.0
    %35 = vmatpush.msra.mxu0 0.0
    %36 = vmatpush.msra.mxu0 0.0
    %37 = vmatpush.msra.mxu0 0.0
    %38 = vmatpush.msra.mxu0 0.0
    %39 = vmatpush.msra.mxu0 0.0
    %40 = vmatpush.msra.mxu0 0.0
    %41 = vmatpush.msra.mxu0 0.0
    %42 = vmatpush.msra.mxu0 0.0
    %43 = vmatpush.msra.mxu0 0.0
    %v44 = vand.u32 %v28, 4294901760
    %45 = vmatpush.msra.mxu0 %v44
    %v46 = vand.u32 %v16, 4294901760
    %47 = vmatpush.msra.mxu0 %v46
    %v48 = vand.u32 %v24, 4294901760
    %v49 = vsub.f32 %v24, %v48
    %v50 = vand.u32 %v49, 4294901760
    %v51 = vsub.f32 %v49, %v50
    %v52 = vand.u32 %v51, 4294901760
    %53 = vmatmul.f32.gmra.mxu0 %v52
    %v54 = vpop.f32.mrf.mxu0
    %v55 = vadd.f32 %v20, %v54
    %56 = vdwg.mxu0
    %57 = vmatpush.msra.mxu0 0.0
    %58 = vmatpush.msra.mxu0 0.0
    %59 = vmatpush.msra.mxu0 0.0
    %60 = vmatpush.msra.mxu0 0.0
    %61 = vmatpush.msra.mxu0 0.0
    %62 = vmatpush.msra.mxu0 0.0
    %63 = vmatpush.msra.mxu0 0.0
    %64 = vmatpush.msra.mxu0 0.0
    %65 = vmatpush.msra.mxu0 0.0
    %66 = vmatpush.msra.mxu0 0.0
    %67 = vmatpush.msra.mxu0 0.0
    %68 = vmatpush.msra.mxu0 0.0
    %69 = vmatpush.msra.mxu0 0.0
    %70 = vmatpush.msra.mxu0 0.0
    %v71 = vand.u32 %v28, 4294901760
    %v72 = vsub.f32 %v28, %v71
    %v73 = vand.u32 %v72, 4294901760
    %v74 = vsub.f32 %v72, %v73
    %v75 = vand.u32 %v74, 4294901760
    %76 = vmatpush.msra.mxu0 %v75
    %v77 = vand.u32 %v16, 4294901760
    %v78 = vsub.f32 %v16, %v77
    %v79 = vand.u32 %v78, 4294901760
    %v80 = vsub.f32 %v78, %v79
    %v81 = vand.u32 %v80, 4294901760
    %82 = vmatpush.msra.mxu0 %v81
    %v83 = vand.u32 %v24, 4294901760
    %84 = vmatmul.f32.gmra.mxu0 %v83
    %v85 = vpop.f32.mrf.mxu0
    %v86 = vadd.f32 %v55, %v85
    %87 = vdwg.mxu0
    %88 = vmatpush.msra.mxu0 0.0
    %89 = vmatpush.msra.mxu0 0.0
    %90 = vmatpush.msra.mxu0 0.0
    %91 = vmatpush.msra.mxu0 0.0
    %92 = vmatpush.msra.mxu0 0.0
    %93 = vmatpush.msra.mxu0 0.0
    %94 = vmatpush.msra.mxu0 0.0
    %95 = vmatpush.msra.mxu0 0.0
    %96 = vmatpush.msra.mxu0 0.0
    %97 = vmatpush.msra.mxu0 0.0
    %98 = vmatpush.msra.mxu0 0.0
    %99 = vmatpush.msra.mxu0 0.0
    %100 = vmatpush.msra.mxu0 0.0
    %101 = vmatpush.msra.mxu0 0.0
    %v102 = vand.u32 %v28, 4294901760
    %v103 = vsub.f32 %v28, %v102
    %104 = vmatpush.msra.mxu0 %v103
    %v105 = vand.u32 %v16, 4294901760
    %v106 = vsub.f32 %v16, %v105
    %107 = vmatpush.msra.mxu0 %v106
    %v108 = vand.u32 %v24, 4294901760
    %v109 = vsub.f32 %v24, %v108
    %110 = vmatmul.f32.gmra.mxu0 %v109
    %v111 = vpop.f32.mrf.mxu0
    %v112 = vadd.f32 %v86, %v111
    %113 = vdwg.mxu0
    %114 = vmatpush.msra.mxu0 0.0
    %115 = vmatpush.msra.mxu0 0.0
    %116 = vmatpush.msra.mxu0 0.0
    %117 = vmatpush.msra.mxu0 0.0
    %118 = vmatpush.msra.mxu0 0.0
    %119 = vmatpush.msra.mxu0 0.0
    %120 = vmatpush.msra.mxu0 0.0
    %121 = vmatpush.msra.mxu0 0.0
    %122 = vmatpush.msra.mxu0 0.0
    %123 = vmatpush.msra.mxu0 0.0
    %124 = vmatpush.msra.mxu0 0.0
    %125 = vmatpush.msra.mxu0 0.0
    %126 = vmatpush.msra.mxu0 0.0
    %127 = vmatpush.msra.mxu0 0.0
    %v128 = vand.u32 %v28, 4294901760
    %129 = vmatpush.msra.mxu0 %v128
    %v130 = vand.u32 %v16, 4294901760
    %131 = vmatpush.msra.mxu0 %v130
    %v132 = vand.u32 %v24, 4294901760
    %v133 = vsub.f32 %v24, %v132
    %v134 = vand.u32 %v133, 4294901760
    %135 = vmatmul.f32.gmra.mxu0 %v134
    %v136 = vpop.f32.mrf.mxu0
    %v137 = vadd.f32 %v112, %v136
    %138 = vdwg.mxu0
    %139 = vmatpush.msra.mxu0 0.0
    %140 = vmatpush.msra.mxu0 0.0
    %141 = vmatpush.msra.mxu0 0.0
    %142 = vmatpush.msra.mxu0 0.0
    %143 = vmatpush.msra.mxu0 0.0
    %144 = vmatpush.msra.mxu0 0.0
    %145 = vmatpush.msra.mxu0 0.0
    %146 = vmatpush.msra.mxu0 0.0
    %147 = vmatpush.msra.mxu0 0.0
    %148 = vmatpush.msra.mxu0 0.0
    %149 = vmatpush.msra.mxu0 0.0
    %150 = vmatpush.msra.mxu0 0.0
    %151 = vmatpush.msra.mxu0 0.0
    %152 = vmatpush.msra.mxu0 0.0
    %v153 = vand.u32 %v28, 4294901760
    %v154 = vsub.f32 %v28, %v153
    %v155 = vand.u32 %v154, 4294901760
    %156 = vmatpush.msra.mxu0 %v155
    %v157 = vand.u32 %v16, 4294901760
    %v158 = vsub.f32 %v16, %v157
    %v159 = vand.u32 %v158, 4294901760
    %160 = vmatpush.msra.mxu0 %v159
    %v161 = vand.u32 %v24, 4294901760
    %162 = vmatmul.f32.gmra.mxu0 %v161
    %v163 = vpop.f32.mrf.mxu0
    %v164 = vadd.f32 %v137, %v163
    %165 = vdwg.mxu0
    %166 = vmatpush.msra.mxu0 0.0
    %167 = vmatpush.msra.mxu0 0.0
    %168 = vmatpush.msra.mxu0 0.0
    %169 = vmatpush.msra.mxu0 0.0
    %170 = vmatpush.msra.mxu0 0.0
    %171 = vmatpush.msra.mxu0 0.0
    %172 = vmatpush.msra.mxu0 0.0
    %173 = vmatpush.msra.mxu0 0.0
    %174 = vmatpush.msra.mxu0 0.0
    %175 = vmatpush.msra.mxu0 0.0
    %176 = vmatpush.msra.mxu0 0.0
    %177 = vmatpush.msra.mxu0 0.0
    %178 = vmatpush.msra.mxu0 0.0
    %179 = vmatpush.msra.mxu0 0.0
    %v180 = vand.u32 %v28, 4294901760
    %181 = vmatpush.msra.mxu0 %v180
    %v182 = vand.u32 %v16, 4294901760
    %183 = vmatpush.msra.mxu0 %v182
    %v184 = vand.u32 %v24, 4294901760
    %185 = vmatmul.f32.gmra.mxu0 %v184
    %v186 = vpop.f32.mrf.mxu0
    %v187 = vadd.f32 %v164, %v186
    %188 = vdwg.mxu0
    %vm189 = vcmask 39936
    %190 = vst.msk [vmem:[#allocation2] sm:$0xff] %vm189, %v187
    // Predicated region
    $region14: #{small_model_forward.1} parent=1 // pred_check
      _
    $region15: #{small_model_forward.1} parent=1 // pred_check_branch
      %192 = sbr.rel (0) target = $region17
    $region16: #{small_model_forward.1} parent=1 // pred_region
      %194 = vsyncadd [#allocation3], 0
      %s196 = sshll.u32 [#allocation2], 4
      %s197 = int_to_ptr.vmem [resolvable:$true] %s196
      %s198 = sshll.u32 %s3, 4
      %s199 = int_to_ptr.hbm [resolvable:$true] %s198
      %201 = dma.vmem_to_hbm [thread:$0]  %s197, 128, %s199, [#allocation3]
    $region17: #{small_model_forward.1} parent=1 // pred_fallthru
      _
    // Predicated region
    $region18: #{small_model_forward.1} parent=1 // pred_check
      _
    $region19: #{small_model_forward.1} parent=1 // pred_check_branch
      %203 = sbr.rel (0) target = $region21
    $region20: #{small_model_forward.1} parent=1 // pred_region
      %205 = dma.done [#allocation3], 128
    $region21: #{small_model_forward.1} parent=1 // pred_fallthru
      _
    %206 = vsyncpa [#allocation3], 1

</llo_original>
